<compile_context>
chip_gen: v5e
topology: v5e:2x2
jax: 0.10.0
libtpu: 0.0.40
codegen_flags: <defaults>
</compile_context>

<pallas_src>
import functools

import jax
import jax.numpy as jnp
from jax.experimental import pallas as pl
from jax.experimental.pallas import tpu as pltpu


# ---------------- layer sizes (PyTorch: W is (out_features, in_features)) ----------
IN1, OUT1 = 8, 6
IN2, OUT2 = 6, 4
IN3, OUT3 = 4, 1

GROUP = 16                 # batch elements packed per 128-lane row
SLOT = 8                   # lanes per group (= IN1; layer-1/2 outputs zero-padded to 8)
LANES = GROUP * SLOT       # 128
OUT_COLS = GROUP * OUT3    # 16  (final packed output width)

SUB_ROWS = 256             # in-kernel chunk: 256 rows = 4096 batch elements
TARGET_BLOCK_ROWS = 2048   # ~32K batch elements per grid step


def _round_up(n, m):
    return ((n + m - 1) // m) * m


def _cdiv(a, b):
    return (a + b - 1) // b


def pack_params(w1, b1, w2, b2, w3, b3):
    """Build block-diagonal (group-packed) weights and tiled bias rows.

    For each of the 16 groups, layer weights act on that group's 8-lane slot:
      wb1: (128, 128)  = blockdiag_16( pad(W1.T, 8x8) )
      wb2: (128, 128)  = blockdiag_16( pad(W2.T, 8x8) )   (zero rows kill pad slots)
      wb3: (128, 16)   = blockdiag_16( pad(W3.T, 8x1) )
    Biases are tiled per group; unused slots get bias 0 (their 0.5 sigmoid output is
    multiplied by zero weight rows downstream, so it never contributes).
    """
    f32 = jnp.float32
    eye = jnp.eye(GROUP, dtype=f32)

    def blk(w_t, rows, cols):
        w_t = w_t.astype(f32)
        return jnp.pad(w_t, ((0, rows - w_t.shape[0]), (0, cols - w_t.shape[1])))

    wb1 = jnp.kron(eye, blk(w1.T, SLOT, SLOT))          # (128, 128)
    wb2 = jnp.kron(eye, blk(w2.T, SLOT, SLOT))          # (128, 128)
    wb3 = jnp.kron(eye, blk(w3.T, SLOT, OUT3))          # (128, 16)

    b1p = jnp.tile(jnp.pad(b1.astype(f32), (0, SLOT - OUT1)), GROUP).reshape(1, LANES)
    b2p = jnp.tile(jnp.pad(b2.astype(f32), (0, SLOT - OUT2)), GROUP).reshape(1, LANES)
    b3p = jnp.tile(b3.astype(f32), GROUP).reshape(1, OUT_COLS)
    return wb1, wb2, wb3, b1p, b2p, b3p


def _sigmoid(h):
    # Exact sigmoid, one EUP op (tanh) per element.
    return 0.5 * jnp.tanh(0.5 * h) + 0.5


def _mlp_kernel(wb1_ref, wb2_ref, wb3_ref, b1_ref, b2_ref, b3_ref, x_ref, o_ref):
    """x_ref: (m_blk, 128) f32 — 16 batch elements per row (8 features each).
       o_ref: (m_blk, 16)  f32 — one output per packed batch element."""
    wb1 = wb1_ref[...]
    wb2 = wb2_ref[...]
    wb3 = wb3_ref[...]
    b1 = b1_ref[...]
    b2 = b2_ref[...]
    b3 = b3_ref[...]

    m_blk = x_ref.shape[0]
    sub = min(SUB_ROWS, m_blk)
    n_sub = _cdiv(m_blk, sub)          # <= 8 by construction (static)

    for c in range(n_sub):
        # Last (possibly partial) chunk is clamped so it overlaps the previous one
        # instead of masking; all starts stay multiples of 8 (sublane aligned) and
        # the overlapping writes are idempotent.
        r0 = min(c * sub, m_blk - sub)
        x = x_ref[r0:r0 + sub, :]                                          # (sub, 128)
        h = _sigmoid(jnp.dot(x, wb1, preferred_element_type=jnp.float32) + b1)
        h = _sigmoid(jnp.dot(h, wb2, preferred_element_type=jnp.float32) + b2)
        h = _sigmoid(jnp.dot(h, wb3, preferred_element_type=jnp.float32) + b3)
        o_ref[r0:r0 + sub, :] = h                                          # (sub, 16)


@jax.jit
def mlp_forward(x, wb1, wb2, wb3, b1p, b2p, b3p):
    """x: (B, 8) f32. Returns (B, 1) f32 — same semantics as the PyTorch module."""
    B = x.shape[0]
    assert x.shape[1] == IN1

    nb = _cdiv(B, GROUP)                                   # packed rows needed
    n_steps = max(_cdiv(nb, TARGET_BLOCK_ROWS), 1)
    if n_steps == 1 and nb >= 16:
        n_steps = 2                                        # keep both v7x TCs busy
    m_blk = _round_up(_cdiv(nb, n_steps), 8)               # rows per grid step
    nb_pad = _round_up(nb, m_blk)
    grid = nb_pad // m_blk
    b_pad = nb_pad * GROUP

    # Free, transpose-less packing: (B,8) -> pad rows -> (nb_pad, 128) row-major.
    x_pack = jnp.pad(x.astype(jnp.float32),
                     ((0, b_pad - B), (0, 0))).reshape(nb_pad, LANES)

    out_pack = pl.pallas_call(
        _mlp_kernel,
        out_shape=jax.ShapeDtypeStruct((nb_pad, OUT_COLS), jnp.float32),
        grid=(grid,),
        in_specs=[
            pl.BlockSpec((LANES, LANES), lambda i: (0, 0)),      # wb1 (fetched once)
            pl.BlockSpec((LANES, LANES), lambda i: (0, 0)),      # wb2
            pl.BlockSpec((LANES, OUT_COLS), lambda i: (0, 0)),   # wb3
            pl.BlockSpec((1, LANES), lambda i: (0, 0)),          # b1 (packed row)
            pl.BlockSpec((1, LANES), lambda i: (0, 0)),          # b2
            pl.BlockSpec((1, OUT_COLS), lambda i: (0, 0)),       # b3
            pl.BlockSpec((m_blk, LANES), lambda i: (i, 0)),      # x tile
        ],
        out_specs=pl.BlockSpec((m_blk, OUT_COLS), lambda i: (i, 0)),
        compiler_params=pltpu.CompilerParams(
            dimension_semantics=("parallel",)),
    )(wb1, wb2, wb3, b1p, b2p, b3p, x_pack)

    # (nb_pad, 16) row-major == batch order -> free reshape, then drop padding.
    return out_pack.reshape(b_pad, 1)[:B]


def init_params(key):
    # Deterministic init mimicking nn.Linear's U(-1/sqrt(fan_in), 1/sqrt(fan_in)),
    # stored in PyTorch convention: W (out_features, in_features), b (out_features,).
    def linear_init(k, fan_in, fan_out):
        kw, kb = jax.random.split(k)
        bound = 1.0 / jnp.sqrt(jnp.float32(fan_in))
        w = jax.random.uniform(kw, (fan_out, fan_in), jnp.float32, -bound, bound)
        b = jax.random.uniform(kb, (fan_out,), jnp.float32, -bound, bound)
        return w, b

    k1, k2, k3 = jax.random.split(key, 3)
    w1, b1 = linear_init(k1, IN1, OUT1)
    w2, b2 = linear_init(k2, IN2, OUT2)
    w3, b3 = linear_init(k3, IN3, OUT3)
    return w1, b1, w2, b2, w3, b3


if __name__ == "__main__":
    key = jax.random.PRNGKey(0)
    kx, kp = jax.random.split(key)

    B = 300   # not a multiple of 16 -> exercises padding and a 2-step grid
    x = jax.random.normal(kx, (B, IN1), jnp.float32)
    w1, b1, w2, b2, w3, b3 = init_params(kp)
    packed = pack_params(w1, b1, w2, b2, w3, b3)

    out = mlp_forward(x, *packed)
    out = jax.block_until_ready(out)

    # Pure-JAX reference (PyTorch semantics: y = x @ W.T + b).
    ref = jax.nn.sigmoid(x @ w1.T + b1)
    ref = jax.nn.sigmoid(ref @ w2.T + b2)
    ref = jax.nn.sigmoid(ref @ w3.T + b3)

    assert out.shape == (B, 1)
    max_diff = float(jnp.max(jnp.abs(out - ref)))
    # Tolerance covers possible reduced-precision f32 MXU passes at default precision.
    assert max_diff < 5e-3, f"mismatch vs reference: max abs diff = {max_diff}"

    print("KERNEL_OK")
</pallas_src>

<mosaic_0001>
module attributes {stable_mosaic.version = 11 : i64} {
  func.func @_mlp_kernel(%arg0: i32, %arg1: memref<128x128xf32, #tpu.memory_space<vmem>>, %arg2: memref<128x128xf32, #tpu.memory_space<vmem>>, %arg3: memref<128x16xf32, #tpu.memory_space<vmem>>, %arg4: memref<1x128xf32, #tpu.memory_space<vmem>>, %arg5: memref<1x128xf32, #tpu.memory_space<vmem>>, %arg6: memref<1x16xf32, #tpu.memory_space<vmem>>, %arg7: memref<16x128xf32, #tpu.memory_space<vmem>>, %arg8: memref<16x16xf32, #tpu.memory_space<vmem>>) attributes {dimension_semantics = [#tpu.dimension_semantics<parallel>], iteration_bounds = array<i64: 2>, scalar_prefetch = 0 : i64, scratch_operands = 0 : i64, tpu.core_type = #tpu.core_type<tc>, window_params = [{pipeline_mode = #tpu.pipeline_mode<synchronous>, transform_indices = @transform_0, window_bounds = array<i64: 128, 128>}, {pipeline_mode = #tpu.pipeline_mode<synchronous>, transform_indices = @transform_1, window_bounds = array<i64: 128, 128>}, {pipeline_mode = #tpu.pipeline_mode<synchronous>, transform_indices = @transform_2, window_bounds = array<i64: 128, 16>}, {pipeline_mode = #tpu.pipeline_mode<synchronous>, transform_indices = @transform_3, window_bounds = array<i64: 1, 128>}, {pipeline_mode = #tpu.pipeline_mode<synchronous>, transform_indices = @transform_4, window_bounds = array<i64: 1, 128>}, {pipeline_mode = #tpu.pipeline_mode<synchronous>, transform_indices = @transform_5, window_bounds = array<i64: 1, 16>}, {transform_indices = @transform_6, window_bounds = array<i64: 16, 128>}, {transform_indices = @transform_7, window_bounds = array<i64: 16, 16>}]} {
    %c0 = arith.constant 0 : index
    %c0_0 = arith.constant 0 : index
    %0 = vector.load %arg1[%c0, %c0_0] : memref<128x128xf32, #tpu.memory_space<vmem>>, vector<128x128xf32>
    %c0_1 = arith.constant 0 : index
    %c0_2 = arith.constant 0 : index
    %1 = vector.load %arg2[%c0_1, %c0_2] : memref<128x128xf32, #tpu.memory_space<vmem>>, vector<128x128xf32>
    %c0_3 = arith.constant 0 : index
    %c0_4 = arith.constant 0 : index
    %2 = vector.load %arg3[%c0_3, %c0_4] : memref<128x16xf32, #tpu.memory_space<vmem>>, vector<128x16xf32>
    %c0_5 = arith.constant 0 : index
    %c0_6 = arith.constant 0 : index
    %3 = vector.load %arg4[%c0_5, %c0_6] : memref<1x128xf32, #tpu.memory_space<vmem>>, vector<1x128xf32>
    %c0_7 = arith.constant 0 : index
    %c0_8 = arith.constant 0 : index
    %4 = vector.load %arg5[%c0_7, %c0_8] : memref<1x128xf32, #tpu.memory_space<vmem>>, vector<1x128xf32>
    %c0_9 = arith.constant 0 : index
    %c0_10 = arith.constant 0 : index
    %5 = vector.load %arg6[%c0_9, %c0_10] : memref<1x16xf32, #tpu.memory_space<vmem>>, vector<1x16xf32>
    %c0_11 = arith.constant 0 : index
    %c0_12 = arith.constant 0 : index
    %6 = vector.load %arg7[%c0_11, %c0_12] : memref<16x128xf32, #tpu.memory_space<vmem>>, vector<16x128xf32>
    %cst = arith.constant dense<0.000000e+00> : vector<16x128xf32>
    %7 = tpu.matmul %6, %0, %cst {dimension_numbers = #tpu.dot_dimension_numbers<[1], [0], [0], [1], [0, 0, 1, 1], [], []>} : vector<16x128xf32>, vector<128x128xf32>, vector<16x128xf32> -> vector<16x128xf32>
    %8 = vector.broadcast %3 : vector<1x128xf32> to vector<16x128xf32>
    %9 = arith.addf %7, %8 : vector<16x128xf32>
    %cst_13 = arith.constant 5.000000e-01 : f32
    %10 = vector.broadcast %cst_13 : f32 to vector<16x128xf32>
    %11 = arith.mulf %10, %9 : vector<16x128xf32>
    %12 = math.tanh %11 : vector<16x128xf32>
    %cst_14 = arith.constant 5.000000e-01 : f32
    %13 = vector.broadcast %cst_14 : f32 to vector<16x128xf32>
    %14 = arith.mulf %13, %12 : vector<16x128xf32>
    %cst_15 = arith.constant 5.000000e-01 : f32
    %15 = vector.broadcast %cst_15 : f32 to vector<16x128xf32>
    %16 = arith.addf %14, %15 : vector<16x128xf32>
    %cst_16 = arith.constant dense<0.000000e+00> : vector<16x128xf32>
    %17 = tpu.matmul %16, %1, %cst_16 {dimension_numbers = #tpu.dot_dimension_numbers<[1], [0], [0], [1], [0, 0, 1, 1], [], []>} : vector<16x128xf32>, vector<128x128xf32>, vector<16x128xf32> -> vector<16x128xf32>
    %18 = vector.broadcast %4 : vector<1x128xf32> to vector<16x128xf32>
    %19 = arith.addf %17, %18 : vector<16x128xf32>
    %cst_17 = arith.constant 5.000000e-01 : f32
    %20 = vector.broadcast %cst_17 : f32 to vector<16x128xf32>
    %21 = arith.mulf %20, %19 : vector<16x128xf32>
    %22 = math.tanh %21 : vector<16x128xf32>
    %cst_18 = arith.constant 5.000000e-01 : f32
    %23 = vector.broadcast %cst_18 : f32 to vector<16x128xf32>
    %24 = arith.mulf %23, %22 : vector<16x128xf32>
    %cst_19 = arith.constant 5.000000e-01 : f32
    %25 = vector.broadcast %cst_19 : f32 to vector<16x128xf32>
    %26 = arith.addf %24, %25 : vector<16x128xf32>
    %cst_20 = arith.constant dense<0.000000e+00> : vector<16x16xf32>
    %27 = tpu.matmul %26, %2, %cst_20 {dimension_numbers = #tpu.dot_dimension_numbers<[1], [0], [0], [1], [0, 0, 1, 1], [], []>} : vector<16x128xf32>, vector<128x16xf32>, vector<16x16xf32> -> vector<16x16xf32>
    %28 = vector.broadcast %5 : vector<1x16xf32> to vector<16x16xf32>
    %29 = arith.addf %27, %28 : vector<16x16xf32>
    %cst_21 = arith.constant 5.000000e-01 : f32
    %30 = vector.broadcast %cst_21 : f32 to vector<16x16xf32>
    %31 = arith.mulf %30, %29 : vector<16x16xf32>
    %32 = math.tanh %31 : vector<16x16xf32>
    %cst_22 = arith.constant 5.000000e-01 : f32
    %33 = vector.broadcast %cst_22 : f32 to vector<16x16xf32>
    %34 = arith.mulf %33, %32 : vector<16x16xf32>
    %cst_23 = arith.constant 5.000000e-01 : f32
    %35 = vector.broadcast %cst_23 : f32 to vector<16x16xf32>
    %36 = arith.addf %34, %35 : vector<16x16xf32>
    %c0_24 = arith.constant 0 : index
    %c0_25 = arith.constant 0 : index
    %37 = vector.load %arg8[%c0_24, %c0_25] : memref<16x16xf32, #tpu.memory_space<vmem>>, vector<16x16xf32>
    tpu.vector_store %arg8[%c0_24, %c0_25], %36 {strides = array<i32>} : memref<16x16xf32, #tpu.memory_space<vmem>>, vector<16x16xf32>,
    return
  }
  func.func @transform_0(%arg0: i32) -> (i32, i32) {
    %c0_i32 = arith.constant 0 : i32
    %c0_i32_0 = arith.constant 0 : i32
    %c0_i32_1 = arith.constant 0 : i32
    return %c0_i32, %c0_i32_0 : i32, i32
  }
  func.func @transform_1(%arg0: i32) -> (i32, i32) {
    %c0_i32 = arith.constant 0 : i32
    %c0_i32_0 = arith.constant 0 : i32
    %c0_i32_1 = arith.constant 0 : i32
    return %c0_i32, %c0_i32_0 : i32, i32
  }
  func.func @transform_2(%arg0: i32) -> (i32, i32) {
    %c0_i32 = arith.constant 0 : i32
    %c0_i32_0 = arith.constant 0 : i32
    %c0_i32_1 = arith.constant 0 : i32
    return %c0_i32, %c0_i32_0 : i32, i32
  }
  func.func @transform_3(%arg0: i32) -> (i32, i32) {
    %c0_i32 = arith.constant 0 : i32
    %c0_i32_0 = arith.constant 0 : i32
    %c0_i32_1 = arith.constant 0 : i32
    return %c0_i32, %c0_i32_0 : i32, i32
  }
  func.func @transform_4(%arg0: i32) -> (i32, i32) {
    %c0_i32 = arith.constant 0 : i32
    %c0_i32_0 = arith.constant 0 : i32
    %c0_i32_1 = arith.constant 0 : i32
    return %c0_i32, %c0_i32_0 : i32, i32
  }
  func.func @transform_5(%arg0: i32) -> (i32, i32) {
    %c0_i32 = arith.constant 0 : i32
    %c0_i32_0 = arith.constant 0 : i32
    %c0_i32_1 = arith.constant 0 : i32
    return %c0_i32, %c0_i32_0 : i32, i32
  }
  func.func @transform_6(%arg0: i32) -> (i32, i32) {
    %c0_i32 = arith.constant 0 : i32
    %c0_i32_0 = arith.constant 0 : i32
    return %arg0, %c0_i32 : i32, i32
  }
  func.func @transform_7(%arg0: i32) -> (i32, i32) {
    %c0_i32 = arith.constant 0 : i32
    %c0_i32_0 = arith.constant 0 : i32
    return %arg0, %c0_i32 : i32, i32
  }
}

</mosaic_0001>

<llo_original>
// kernel: mlp_forward.1
$region0: #{mlp_forward.1}
  #allocation0 [shape = 'u32[]', space=smem, size = 0x4, offset = 0x4, fixed_abs, tag = 'smem constant byte address 0x4 - core index']
  #allocation1 [shape = 'u32[72,128]{1,0:T(1,128)}', space=vmem, size = 0x9000, scoped, tag = 'internal scratch']
  %s0 = inlined_call_operand.vmem [shape: f32[128,128], index: 0, kind: input, shape index: {}]
  %s1 = inlined_call_operand.vmem [shape: f32[128,128], index: 1, kind: input, shape index: {}]
  %s2 = inlined_call_operand.vmem [shape: f32[128,16], index: 2, kind: input, shape index: {}]
  %s3 = inlined_call_operand.vmem [shape: f32[1,128], index: 3, kind: input, shape index: {}]
  %s4 = inlined_call_operand.vmem [shape: f32[1,128], index: 4, kind: input, shape index: {}]
  %s5 = inlined_call_operand.vmem [shape: f32[1,16], index: 5, kind: input, shape index: {}]
  %s6 = inlined_call_operand.vmem [shape: f32[32,128], index: 6, kind: input, shape index: {}]
  %s7 = inlined_call_operand.vmem [shape: f32[32,16], index: 7, kind: output, shape index: {}]
  %s8 = sld [smem:[#allocation0]]
  $region61: #{mlp_forward.1} parent=0
    _
  %s10 = ssub.s32 1, %s8
  %s11 = scalar_select 0, %s10, %s8
  loop: start=0, step=1, limit=4
  $region2: #{mlp_forward.1} parent=0 // loop_pre_header
    _
  $region3: #{mlp_forward.1} parent=0 // loop_header
    %s13 = sphi 0, %s17
    %p14 = scmp.ge.s32.totalorder %s13, 4
    %s21 = sphi 0, %s21
    %s23 = sphi 0, %s21
    %s24 = sphi 0, %s23
    %s38 = sphi 0, %s24
    %s42 = sphi 0, %s42
    %s44 = sphi 0, %s42
    %s45 = sphi 0, %s44
    %s59 = sphi 0, %s45
    %s63 = sphi 0, %s63
    %s65 = sphi 0, %s63
    %s66 = sphi 0, %s65
    %s80 = sphi 0, %s66
    %s84 = sphi 0, %s84
    %s86 = sphi 0, %s84
    %s87 = sphi 0, %s86
    %s101 = sphi 0, %s87
    %s105 = sphi 0, %s105
    %s107 = sphi 0, %s105
    %s108 = sphi 0, %s107
    %s122 = sphi 0, %s108
    %s126 = sphi 0, %s126
    %s128 = sphi 0, %s126
    %s129 = sphi 0, %s128
    %s143 = sphi 0, %s129
    %s149 = sphi 0, %s151
    %s152 = sphi 0, %s149
    %s153 = sphi 0, %s152
    %s169 = sphi 0, %s153
    %s175 = sphi 0, %s177
    %s178 = sphi 0, %s175
    %s179 = sphi 0, %s178
    %s195 = sphi 0, %s179
  $region4: #{mlp_forward.1} parent=0 // loop_header_branch
    %16 = sbr.rel (%p14) target = $region8
  $region5: #{mlp_forward.1} parent=0 // loop_body
    %s18 = ssub.s32 %s13, 1
    %s19 = ssub.s32 %s13, 2
    %s20 = sadd.s32 %s13, 1
    %s22 = sadd.s32 %s21, 1
    %p25 = scmp.eq.s32.totalorder %s13, 1
    %p26 = scmp.ne.s32.totalorder %s21, %s23
    %p27 = scmp.eq.s32.totalorder %s13, 0
    %p28 = por %p26, %p27
    %p29 = scmp.ne.s32.totalorder %s21, %s23
    %p30 = scmp.eq.s32.totalorder %s18, 1
    %p31 = por %p29, %p30
    %p32 = scmp.ne.s32.totalorder %s23, %s24
    %p33 = scmp.eq.s32.totalorder %s18, 0
    %p34 = por %p32, %p33
    %p35 = scmp.ne.s32.totalorder %s23, %s24
    %p36 = scmp.eq.s32.totalorder %s19, 1
    %p37 = por %p35, %p36
    %p39 = scmp.ne.s32.totalorder %s24, %s38
    %p40 = scmp.eq.s32.totalorder %s19, 0
    %p41 = por %p39, %p40
    %s43 = sadd.s32 %s42, 1
    %p46 = scmp.eq.s32.totalorder %s13, 1
    %p47 = scmp.ne.s32.totalorder %s42, %s44
    %p48 = scmp.eq.s32.totalorder %s13, 0
    %p49 = por %p47, %p48
    %p50 = scmp.ne.s32.totalorder %s42, %s44
    %p51 = scmp.eq.s32.totalorder %s18, 1
    %p52 = por %p50, %p51
    %p53 = scmp.ne.s32.totalorder %s44, %s45
    %p54 = scmp.eq.s32.totalorder %s18, 0
    %p55 = por %p53, %p54
    %p56 = scmp.ne.s32.totalorder %s44, %s45
    %p57 = scmp.eq.s32.totalorder %s19, 1
    %p58 = por %p56, %p57
    %p60 = scmp.ne.s32.totalorder %s45, %s59
    %p61 = scmp.eq.s32.totalorder %s19, 0
    %p62 = por %p60, %p61
    %s64 = sadd.s32 %s63, 1
    %p67 = scmp.eq.s32.totalorder %s13, 1
    %p68 = scmp.ne.s32.totalorder %s63, %s65
    %p69 = scmp.eq.s32.totalorder %s13, 0
    %p70 = por %p68, %p69
    %p71 = scmp.ne.s32.totalorder %s63, %s65
    %p72 = scmp.eq.s32.totalorder %s18, 1
    %p73 = por %p71, %p72
    %p74 = scmp.ne.s32.totalorder %s65, %s66
    %p75 = scmp.eq.s32.totalorder %s18, 0
    %p76 = por %p74, %p75
    %p77 = scmp.ne.s32.totalorder %s65, %s66
    %p78 = scmp.eq.s32.totalorder %s19, 1
    %p79 = por %p77, %p78
    %p81 = scmp.ne.s32.totalorder %s66, %s80
    %p82 = scmp.eq.s32.totalorder %s19, 0
    %p83 = por %p81, %p82
    %s85 = sadd.s32 %s84, 1
    %p88 = scmp.eq.s32.totalorder %s13, 1
    %p89 = scmp.ne.s32.totalorder %s84, %s86
    %p90 = scmp.eq.s32.totalorder %s13, 0
    %p91 = por %p89, %p90
    %p92 = scmp.ne.s32.totalorder %s84, %s86
    %p93 = scmp.eq.s32.totalorder %s18, 1
    %p94 = por %p92, %p93
    %p95 = scmp.ne.s32.totalorder %s86, %s87
    %p96 = scmp.eq.s32.totalorder %s18, 0
    %p97 = por %p95, %p96
    %p98 = scmp.ne.s32.totalorder %s86, %s87
    %p99 = scmp.eq.s32.totalorder %s19, 1
    %p100 = por %p98, %p99
    %p102 = scmp.ne.s32.totalorder %s87, %s101
    %p103 = scmp.eq.s32.totalorder %s19, 0
    %p104 = por %p102, %p103
    %s106 = sadd.s32 %s105, 1
    %p109 = scmp.eq.s32.totalorder %s13, 1
    %p110 = scmp.ne.s32.totalorder %s105, %s107
    %p111 = scmp.eq.s32.totalorder %s13, 0
    %p112 = por %p110, %p111
    %p113 = scmp.ne.s32.totalorder %s105, %s107
    %p114 = scmp.eq.s32.totalorder %s18, 1
    %p115 = por %p113, %p114
    %p116 = scmp.ne.s32.totalorder %s107, %s108
    %p117 = scmp.eq.s32.totalorder %s18, 0
    %p118 = por %p116, %p117
    %p119 = scmp.ne.s32.totalorder %s107, %s108
    %p120 = scmp.eq.s32.totalorder %s19, 1
    %p121 = por %p119, %p120
    %p123 = scmp.ne.s32.totalorder %s108, %s122
    %p124 = scmp.eq.s32.totalorder %s19, 0
    %p125 = por %p123, %p124
    %s127 = sadd.s32 %s126, 1
    %p130 = scmp.eq.s32.totalorder %s13, 1
    %p131 = scmp.ne.s32.totalorder %s126, %s128
    %p132 = scmp.eq.s32.totalorder %s13, 0
    %p133 = por %p131, %p132
    %p134 = scmp.ne.s32.totalorder %s126, %s128
    %p135 = scmp.eq.s32.totalorder %s18, 1
    %p136 = por %p134, %p135
    %p137 = scmp.ne.s32.totalorder %s128, %s129
    %p138 = scmp.eq.s32.totalorder %s18, 0
    %p139 = por %p137, %p138
    %p140 = scmp.ne.s32.totalorder %s128, %s129
    %p141 = scmp.eq.s32.totalorder %s19, 1
    %p142 = por %p140, %p141
    %p144 = scmp.ne.s32.totalorder %s129, %s143
    %p145 = scmp.eq.s32.totalorder %s19, 0
    %p146 = por %p144, %p145
    %s147 = ssub.s32 %s13, %s20
    %p148 = scmp.eq.s32.totalorder %s147, 0
    %s150 = sadd.s32 %s149, 1
    %s151 = scalar_select %p148, %s149, %s150
    %p154 = pneg %p148
    %p155 = scmp.eq.s32.totalorder %s13, 1
    %p156 = por %p154, %p155
    %p157 = scmp.ne.s32.totalorder %s149, %s152
    %p158 = scmp.eq.s32.totalorder %s13, 0
    %p159 = por %p157, %p158
    %p160 = scmp.ne.s32.totalorder %s149, %s152
    %p161 = scmp.eq.s32.totalorder %s18, 1
    %p162 = por %p160, %p161
    %p163 = scmp.ne.s32.totalorder %s152, %s153
    %p164 = scmp.eq.s32.totalorder %s18, 0
    %p165 = por %p163, %p164
    %p166 = scmp.ne.s32.totalorder %s152, %s153
    %p167 = scmp.eq.s32.totalorder %s19, 1
    %p168 = por %p166, %p167
    %p170 = scmp.ne.s32.totalorder %s153, %s169
    %p171 = scmp.eq.s32.totalorder %s19, 0
    %p172 = por %p170, %p171
    %s173 = ssub.s32 %s13, %s20
    %p174 = scmp.eq.s32.totalorder %s173, 0
    %s176 = sadd.s32 %s175, 1
    %s177 = scalar_select %p174, %s175, %s176
    %p180 = pneg %p174
    %p181 = scmp.eq.s32.totalorder %s13, 1
    %p182 = por %p180, %p181
    %p183 = scmp.ne.s32.totalorder %s175, %s178
    %p184 = scmp.eq.s32.totalorder %s13, 0
    %p185 = por %p183, %p184
    %p186 = scmp.ne.s32.totalorder %s175, %s178
    %p187 = scmp.eq.s32.totalorder %s18, 1
    %p188 = por %p186, %p187
    %p189 = scmp.ne.s32.totalorder %s178, %s179
    %p190 = scmp.eq.s32.totalorder %s18, 0
    %p191 = por %p189, %p190
    %p192 = scmp.ne.s32.totalorder %s178, %s179
    %p193 = scmp.eq.s32.totalorder %s19, 1
    %p194 = por %p192, %p193
    %p196 = scmp.ne.s32.totalorder %s179, %s195
    %p197 = scmp.eq.s32.totalorder %s19, 0
    %p198 = por %p196, %p197
    %p199 = scmp.le.s32.totalorder 1, %s13
    %p200 = scmp.lt.s32.totalorder %s13, 3
    %p201 = pnand %p199, %p200
    %p202 = pneg %p201
    // Predicated region
    $region9: #{mlp_forward.1} parent=5 // pred_check
      _
    $region10: #{mlp_forward.1} parent=5 // pred_check_branch
      %204 = sbr.rel (%p201) target = $region12
    $region11: #{mlp_forward.1} parent=5 // pred_region
      %s205 = ssub.s32 %s13, 1
      // Predicated region
      $region13: #{mlp_forward.1} parent=11 // pred_check
        %p206 = pneg %p34
      $region14: #{mlp_forward.1} parent=11 // pred_check_branch
        %208 = sbr.rel (%p206) target = $region16
      $region15: #{mlp_forward.1} parent=11 // pred_region
        _
      $region16: #{mlp_forward.1} parent=11 // pred_fallthru
        _
      // Predicated region
      $region17: #{mlp_forward.1} parent=11 // pred_check
        %p209 = pneg %p55
      $region18: #{mlp_forward.1} parent=11 // pred_check_branch
        %211 = sbr.rel (%p209) target = $region20
      $region19: #{mlp_forward.1} parent=11 // pred_region
        _
      $region20: #{mlp_forward.1} parent=11 // pred_fallthru
        _
      // Predicated region
      $region21: #{mlp_forward.1} parent=11 // pred_check
        %p212 = pneg %p76
      $region22: #{mlp_forward.1} parent=11 // pred_check_branch
        %214 = sbr.rel (%p212) target = $region24
      $region23: #{mlp_forward.1} parent=11 // pred_region
        _
      $region24: #{mlp_forward.1} parent=11 // pred_fallthru
        _
      // Predicated region
      $region25: #{mlp_forward.1} parent=11 // pred_check
        %p215 = pneg %p97
      $region26: #{mlp_forward.1} parent=11 // pred_check_branch
        %217 = sbr.rel (%p215) target = $region28
      $region27: #{mlp_forward.1} parent=11 // pred_region
        _
      $region28: #{mlp_forward.1} parent=11 // pred_fallthru
        _
      // Predicated region
      $region29: #{mlp_forward.1} parent=11 // pred_check
        %p218 = pneg %p118
      $region30: #{mlp_forward.1} parent=11 // pred_check_branch
        %220 = sbr.rel (%p218) target = $region32
      $region31: #{mlp_forward.1} parent=11 // pred_region
        _
      $region32: #{mlp_forward.1} parent=11 // pred_fallthru
        _
      // Predicated region
      $region33: #{mlp_forward.1} parent=11 // pred_check
        %p221 = pneg %p139
      $region34: #{mlp_forward.1} parent=11 // pred_check_branch
        %223 = sbr.rel (%p221) target = $region36
      $region35: #{mlp_forward.1} parent=11 // pred_region
        _
      $region36: #{mlp_forward.1} parent=11 // pred_fallthru
        _
    $region12: #{mlp_forward.1} parent=5 // pred_fallthru
      _
    %p224 = scmp.lt.s32.totalorder %s13, 2
    // Predicated region
    $region37: #{mlp_forward.1} parent=5 // pred_check
      %p225 = pneg %p224
    $region38: #{mlp_forward.1} parent=5 // pred_check_branch
      %227 = sbr.rel (%p225) target = $region40
    $region39: #{mlp_forward.1} parent=5 // pred_region
      // Predicated region
      $region41: #{mlp_forward.1} parent=39 // pred_check
        %p228 = pneg %p159
      $region42: #{mlp_forward.1} parent=39 // pred_check_branch
        %230 = sbr.rel (%p228) target = $region44
      $region43: #{mlp_forward.1} parent=39 // pred_region
        %s231 = smul.u32 2, %s13
        %p232 = scmp.lt.s32.totalorder %s231, 3
        %s233 = scalar_select %p232, %s231, 3
        %s234 = smul.addr %s233, 8
        %s235 = scalar_lea.vmem %s6, %s234
        %s236 = smul.u32 2, %s13
      $region44: #{mlp_forward.1} parent=39 // pred_fallthru
        _
    $region40: #{mlp_forward.1} parent=5 // pred_fallthru
      _
    %p237 = scmp.le.s32.totalorder 1, %s13
    %p238 = scmp.lt.s32.totalorder %s13, 3
    %p239 = pnand %p237, %p238
    %p240 = pneg %p239
    // Predicated region
    $region45: #{mlp_forward.1} parent=5 // pred_check
      _
    $region46: #{mlp_forward.1} parent=5 // pred_check_branch
      %242 = sbr.rel (%p239) target = $region48
    $region47: #{mlp_forward.1} parent=5 // pred_region
      %s243 = ssub.s32 %s13, 1
      %p244 = pneg %p34
      %p245 = pneg %p31
      %p246 = pneg %p55
      %p247 = pneg %p52
      %p248 = pneg %p76
      %p249 = pneg %p73
      %p250 = pneg %p97
      %p251 = pneg %p94
      %p252 = pneg %p118
      %p253 = pneg %p115
      %p254 = pneg %p139
      %p255 = pneg %p136
      %s256 = smul.u32 2, %s18
      %p257 = scmp.lt.s32.totalorder %s256, 3
      %s258 = scalar_select %p257, %s256, 3
      %s259 = smul.addr %s258, 8
      %s260 = scalar_lea.vmem %s6, %s259
      %p261 = pneg %p165
      %p262 = pneg %p162
      %p263 = pneg %p191
      %p264 = pneg %p188
      %s265 = smul.u32 2, %s18
      %p266 = scmp.lt.s32.totalorder %s265, 3
      %s267 = scalar_select %p266, %s265, 3
      %s268 = smul.addr %s267, 8
      %s269 = scalar_lea.vmem %s7, %s268
      %s270 = smul.u32 2, %s18
      %p271 = scmp.lt.s32.totalorder %s270, 3
      %s272 = scalar_select %p271, %s270, 3
      %s273 = smul.addr %s272, 8
      %s274 = scalar_lea.vmem %s6, %s273
      %s275 = smul.u32 2, %s18
      %s276 = smul.u32 2, %s18
      %p277 = scmp.lt.s32.totalorder %s276, 3
      %s278 = scalar_select %p277, %s276, 3
      %s279 = smul.addr %s278, 8
      %s280 = scalar_lea.vmem %s7, %s279
      %s281 = smul.u32 2, %s18
      %v282 = vld [vmem:[%s0] sm:$0xff]
      %v283 = vld [vmem:[%s0 + $0x8] sm:$0xff]
      %v284 = vld [vmem:[%s0 + $0x10] sm:$0xff]
      %v285 = vld [vmem:[%s0 + $0x18] sm:$0xff]
      %v286 = vld [vmem:[%s0 + $0x20] sm:$0xff]
      %v287 = vld [vmem:[%s0 + $0x28] sm:$0xff]
      %v288 = vld [vmem:[%s0 + $0x30] sm:$0xff]
      %v289 = vld [vmem:[%s0 + $0x38] sm:$0xff]
      %v290 = vld [vmem:[%s0 + $0x40] sm:$0xff]
      %v291 = vld [vmem:[%s0 + $0x48] sm:$0xff]
      %v292 = vld [vmem:[%s0 + $0x50] sm:$0xff]
      %v293 = vld [vmem:[%s0 + $0x58] sm:$0xff]
      %v294 = vld [vmem:[%s0 + $0x60] sm:$0xff]
      %v295 = vld [vmem:[%s0 + $0x68] sm:$0xff]
      %v296 = vld [vmem:[%s0 + $0x70] sm:$0xff]
      %v297 = vld [vmem:[%s0 + $0x78] sm:$0xff]
      %v298 = vld [vmem:[%s1] sm:$0xff]
      %v299 = vld [vmem:[%s1 + $0x8] sm:$0xff]
      %v300 = vld [vmem:[%s1 + $0x10] sm:$0xff]
      %v301 = vld [vmem:[%s1 + $0x18] sm:$0xff]
      %v302 = vld [vmem:[%s1 + $0x20] sm:$0xff]
      %v303 = vld [vmem:[%s1 + $0x28] sm:$0xff]
      %v304 = vld [vmem:[%s1 + $0x30] sm:$0xff]
      %v305 = vld [vmem:[%s1 + $0x38] sm:$0xff]
      %v306 = vld [vmem:[%s1 + $0x40] sm:$0xff]
      %v307 = vld [vmem:[%s1 + $0x48] sm:$0xff]
      %v308 = vld [vmem:[%s1 + $0x50] sm:$0xff]
      %v309 = vld [vmem:[%s1 + $0x58] sm:$0xff]
      %v310 = vld [vmem:[%s1 + $0x60] sm:$0xff]
      %v311 = vld [vmem:[%s1 + $0x68] sm:$0xff]
      %v312 = vld [vmem:[%s1 + $0x70] sm:$0xff]
      %v313 = vld [vmem:[%s1 + $0x78] sm:$0xff]
      %v314 = vld [vmem:[%s2] sm:$0xff]
      %v315 = vld [vmem:[%s2 + $0x8] sm:$0xff]
      %v316 = vld [vmem:[%s2 + $0x10] sm:$0xff]
      %v317 = vld [vmem:[%s2 + $0x18] sm:$0xff]
      %v318 = vld [vmem:[%s2 + $0x20] sm:$0xff]
      %v319 = vld [vmem:[%s2 + $0x28] sm:$0xff]
      %v320 = vld [vmem:[%s2 + $0x30] sm:$0xff]
      %v321 = vld [vmem:[%s2 + $0x38] sm:$0xff]
      %v322 = vld [vmem:[%s2 + $0x40] sm:$0xff]
      %v323 = vld [vmem:[%s2 + $0x48] sm:$0xff]
      %v324 = vld [vmem:[%s2 + $0x50] sm:$0xff]
      %v325 = vld [vmem:[%s2 + $0x58] sm:$0xff]
      %v326 = vld [vmem:[%s2 + $0x60] sm:$0xff]
      %v327 = vld [vmem:[%s2 + $0x68] sm:$0xff]
      %v328 = vld [vmem:[%s2 + $0x70] sm:$0xff]
      %v329 = vld [vmem:[%s2 + $0x78] sm:$0xff]
      %v330 = vld [vmem:[%s3] sm:$0x1]
      %v331 = vld [vmem:[%s4] sm:$0x1]
      %v332 = vld [vmem:[%s5] sm:$0x1]
      %v333 = vld [vmem:[%s274] sm:$0xff]
      %v334 = vld [vmem:[%s274 + $0x8] sm:$0xff]
      %v336 = vperm.slane %v330, 0
      %338 = vmatpush.msra.mxu0 %v297
      %339 = vmatpush.msra.mxu0 %v296
      %340 = vmatpush.msra.mxu0 %v295
      %341 = vmatpush.msra.mxu0 %v294
      %342 = vmatpush.msra.mxu0 %v293
      %343 = vmatpush.msra.mxu0 %v292
      %344 = vmatpush.msra.mxu0 %v291
      %345 = vmatpush.msra.mxu0 %v290
      %346 = vmatpush.msra.mxu0 %v289
      %347 = vmatpush.msra.mxu0 %v288
      %348 = vmatpush.msra.mxu0 %v287
      %349 = vmatpush.msra.mxu0 %v286
      %350 = vmatpush.msra.mxu0 %v285
      %351 = vmatpush.msra.mxu0 %v284
      %352 = vmatpush.msra.mxu0 %v283
      %353 = vmatpush.msra.mxu0 %v282
      %354 = vmatmul.f32.gmra.mxu0 %v333
      %v355 = vpop.f32.mrf.mxu0
      %v356 = vadd.f32 %v336, %v355
      %357 = vmatmul.f32.gmra.mxu0 %v334
      %v358 = vpop.f32.mrf.mxu0
      %v359 = vadd.f32 %v336, %v358
      %360 = vdwg.mxu0
      %v361 = vmul.f32 %v356, 0.5
      %v362 = vmul.f32 %v359, 0.5
      %v363 = vtanh.pop %v361
      %v364 = vtanh.pop %v362
      %v365 = vmul.f32 %v363, 0.5
      %v366 = vmul.f32 %v364, 0.5
      %v367 = vadd.f32 %v365, 0.5
      %v368 = vadd.f32 %v366, 0.5
      %v370 = vperm.slane %v331, 0
      %372 = vmatpush.msra.mxu0 %v313
      %373 = vmatpush.msra.mxu0 %v312
      %374 = vmatpush.msra.mxu0 %v311
      %375 = vmatpush.msra.mxu0 %v310
      %376 = vmatpush.msra.mxu0 %v309
      %377 = vmatpush.msra.mxu0 %v308
      %378 = vmatpush.msra.mxu0 %v307
      %379 = vmatpush.msra.mxu0 %v306
      %380 = vmatpush.msra.mxu0 %v305
      %381 = vmatpush.msra.mxu0 %v304
      %382 = vmatpush.msra.mxu0 %v303
      %383 = vmatpush.msra.mxu0 %v302
      %384 = vmatpush.msra.mxu0 %v301
      %385 = vmatpush.msra.mxu0 %v300
      %386 = vmatpush.msra.mxu0 %v299
      %387 = vmatpush.msra.mxu0 %v298
      %388 = vmatmul.f32.gmra.mxu0 %v367
      %v389 = vpop.f32.mrf.mxu0
      %v390 = vadd.f32 %v370, %v389
      %391 = vmatmul.f32.gmra.mxu0 %v368
      %v392 = vpop.f32.mrf.mxu0
      %v393 = vadd.f32 %v370, %v392
      %394 = vdwg.mxu0
      %v395 = vmul.f32 %v390, 0.5
      %v396 = vmul.f32 %v393, 0.5
      %v397 = vtanh.pop %v395
      %v398 = vtanh.pop %v396
      %v399 = vmul.f32 %v397, 0.5
      %v400 = vmul.f32 %v398, 0.5
      %v401 = vadd.f32 %v399, 0.5
      %v402 = vadd.f32 %v400, 0.5
      %v404 = vperm.slane %v332, 0
      %406 = vmatpush.msra.mxu0 %v329
      %407 = vmatpush.msra.mxu0 %v328
      %408 = vmatpush.msra.mxu0 %v327
      %409 = vmatpush.msra.mxu0 %v326
      %410 = vmatpush.msra.mxu0 %v325
      %411 = vmatpush.msra.mxu0 %v324
      %412 = vmatpush.msra.mxu0 %v323
      %413 = vmatpush.msra.mxu0 %v322
      %414 = vmatpush.msra.mxu0 %v321
      %415 = vmatpush.msra.mxu0 %v320
      %416 = vmatpush.msra.mxu0 %v319
      %417 = vmatpush.msra.mxu0 %v318
      %418 = vmatpush.msra.mxu0 %v317
      %419 = vmatpush.msra.mxu0 %v316
      %420 = vmatpush.msra.mxu0 %v315
      %421 = vmatpush.msra.mxu0 %v314
      %422 = vmatmul.f32.gmra.mxu0 %v401
      %v423 = vpop.f32.mrf.mxu0
      %v424 = vadd.f32 %v404, %v423
      %425 = vmatmul.f32.gmra.mxu0 %v402
      %v426 = vpop.f32.mrf.mxu0
      %v427 = vadd.f32 %v404, %v426
      %428 = vdwg.mxu0
      %v429 = vmul.f32 %v424, 0.5
      %v430 = vmul.f32 %v427, 0.5
      %v431 = vtanh.pop %v429
      %v432 = vtanh.pop %v430
      %v433 = vmul.f32 %v431, 0.5
      %v434 = vmul.f32 %v432, 0.5
      %v435 = vadd.f32 %v433, 0.5
      %v436 = vadd.f32 %v434, 0.5
      %vm437 = vcmask 130048
      %438 = vst.msk [vmem:[%s280] sm:$0xff] %vm437, %v435
      %439 = vst.msk [vmem:[%s280 + $0x8] sm:$0xff] %vm437, %v436
      %s440 = smul.u32 2, %s18
      %p441 = scmp.lt.s32.totalorder %s440, 3
      %s442 = scalar_select %p441, %s440, 3
      %s443 = smul.addr %s442, 8
      %s444 = scalar_lea.vmem %s7, %s443
      // Predicated region
      $region49: #{mlp_forward.1} parent=47 // pred_check
        %p445 = pneg %p188
      $region50: #{mlp_forward.1} parent=47 // pred_check_branch
        %447 = sbr.rel (%p445) target = $region52
      $region51: #{mlp_forward.1} parent=47 // pred_region
        %s448 = smul.u32 2, %s18
      $region52: #{mlp_forward.1} parent=47 // pred_fallthru
        _
    $region48: #{mlp_forward.1} parent=5 // pred_fallthru
      _
    %p449 = scmp.le.s32.totalorder 2, %s13
    // Predicated region
    $region53: #{mlp_forward.1} parent=5 // pred_check
      %p450 = pneg %p449
    $region54: #{mlp_forward.1} parent=5 // pred_check_branch
      %452 = sbr.rel (%p450) target = $region56
    $region55: #{mlp_forward.1} parent=5 // pred_region
      %s453 = ssub.s32 %s13, 2
      // Predicated region
      $region57: #{mlp_forward.1} parent=55 // pred_check
        %p454 = pneg %p194
      $region58: #{mlp_forward.1} parent=55 // pred_check_branch
        %456 = sbr.rel (%p454) target = $region60
      $region59: #{mlp_forward.1} parent=55 // pred_region
        %s457 = smul.u32 2, %s19
        %p458 = scmp.lt.s32.totalorder %s457, 3
        %s459 = scalar_select %p458, %s457, 3
        %s460 = smul.addr %s459, 8
        %s461 = scalar_lea.vmem %s7, %s460
      $region60: #{mlp_forward.1} parent=55 // pred_fallthru
        _
    $region56: #{mlp_forward.1} parent=5 // pred_fallthru
      _
  $region6: #{mlp_forward.1} parent=0 // loop_footer
    %s17 = sadd.s32 1, %s13
  $region7: #{mlp_forward.1} parent=0 // loop_footer_branch
    %12 = sbr.rel target = $region3
  $region8: #{mlp_forward.1} parent=0 // loop_exit
    _

</llo_original>
